<compile_context>
chip_gen: v5e
topology: v5e:2x2
jax: 0.10.0
libtpu: 0.0.40
codegen_flags: <defaults>
</compile_context>

<pallas_src>
import jax
import jax.numpy as jnp
from jax.experimental import pallas as pl
from jax.experimental.pallas import tpu as pltpu


def _se_kernel(x_ref, w1t_ref, w2t_ref, o_ref):
    # x_ref : (tb, C, L)  input dtype
    # w1t   : (C, H)      = W1.T   (H = C // reduction)
    # w2t   : (H, C)      = W2.T
    # o_ref : (tb, C, L)
    x = x_ref[...]                                   # keep native dtype (no fp32 copy)
    l = x_ref.shape[-1]

    # Squeeze: mean over the length axis with fp32 accumulation.
    y = jnp.sum(x, axis=-1, dtype=jnp.float32) * jnp.float32(1.0 / l)   # (tb, C)

    # Excitation: fc1 -> ReLU -> fc2 -> sigmoid (tiny fp32 matmuls, EUP sigmoid).
    h = jnp.dot(y, w1t_ref[...].astype(jnp.float32),
                preferred_element_type=jnp.float32)
    h = jnp.maximum(h, 0.0)                                             # (tb, H)
    s = jnp.dot(h, w2t_ref[...].astype(jnp.float32),
                preferred_element_type=jnp.float32)
    s = jax.nn.sigmoid(s)                                               # (tb, C)

    # Scale: broadcast the channel gates over L in the input dtype
    # (bf16 VALU on v6e/v7x; for fp32 inputs this stays fp32).
    o_ref[...] = (x * s[:, :, None].astype(x.dtype)).astype(o_ref.dtype)


def se_block(x, w1, w2, *, block_bytes_target=4 * 1024 * 1024):
    """SE block forward.

    x : (B, C, L)      input
    w1: (C // r, C)    torch nn.Linear layout (out_features, in_features), bias=False
    w2: (C, C // r)    torch nn.Linear layout, bias=False
    """
    b, c, l = x.shape
    h = w1.shape[0]
    w1t = jnp.asarray(w1).T          # (C, H)
    w2t = jnp.asarray(w2).T          # (H, C)

    # Pick the batch tile so one (tb, C, L) tile is <= ~4 MiB of padded VMEM;
    # with double-buffered input + output that is ~16 MiB, comfortably under
    # the 32 MiB scoped limit (and v7x's 64 MiB physical VMEM).
    c_pad = -(-c // 8) * 8              # sublane padding
    l_pad = -(-l // 128) * 128          # lane padding
    per_batch_row = c_pad * l_pad * 4   # conservative fp32-equivalent bytes
    tb = max(1, min(b, block_bytes_target // per_batch_row))
    grid = (pl.cdiv(b, tb),)

    itemsize = jnp.dtype(x.dtype).itemsize
    cost = pl.CostEstimate(
        flops=4 * b * c * h + 2 * b * c * l,            # two tiny matmuls + mean/scale
        transcendentals=b * c,                          # sigmoid
        bytes_accessed=2 * b * c * l * itemsize + 2 * c * h * 4,
    )

    return pl.pallas_call(
        _se_kernel,
        out_shape=jax.ShapeDtypeStruct((b, c, l), x.dtype),
        grid=grid,
        in_specs=[
            pl.BlockSpec((tb, c, l), lambda i: (i, 0, 0)),   # batch-tiled x
            pl.BlockSpec((c, h), lambda i: (0, 0)),          # weights stay VMEM-resident
            pl.BlockSpec((h, c), lambda i: (0, 0)),
        ],
        out_specs=pl.BlockSpec((tb, c, l), lambda i: (i, 0, 0)),
        compiler_params=pltpu.CompilerParams(
            dimension_semantics=("parallel",),               # megacore split on v7x
            vmem_limit_bytes=32 * 1024 * 1024,
        ),
        cost_estimate=cost,
    )(x, w1t, w2t)


def se_block_ref(x, w1, w2):
    """Pure-JAX reference mirroring the PyTorch module."""
    y = jnp.mean(x, axis=-1)                     # (B, C)
    h = jnp.maximum(y @ w1.T, 0.0)               # (B, C//r)
    s = jax.nn.sigmoid(h @ w2.T)                 # (B, C)
    return x * s[:, :, None]


if __name__ == "__main__":
    # Small shapes consistent with the module: reduction=16 -> hidden = C // 16.
    # L = 128 keeps the stored block lane-dense.
    B, C, L = 4, 64, 128
    REDUCTION = 16
    H = C // REDUCTION

    key = jax.random.PRNGKey(0)
    kx, k1, k2 = jax.random.split(key, 3)

    x = jax.random.normal(kx, (B, C, L), dtype=jnp.float32)
    # Deterministic synthetic weights (torch Linear layout: (out_features, in_features)).
    w1 = jax.random.normal(k1, (H, C), dtype=jnp.float32) * 0.1   # fc1, bias=False
    w2 = jax.random.normal(k2, (C, H), dtype=jnp.float32) * 0.1   # fc2, bias=False

    out = jax.block_until_ready(se_block(x, w1, w2))

    ref = se_block_ref(x, w1, w2)
    assert out.shape == (B, C, L)
    assert jnp.allclose(out, ref, atol=1e-5, rtol=1e-5), "mismatch vs reference"

    print("KERNEL_OK")
</pallas_src>

<mosaic_0001>
module attributes {stable_mosaic.version = 11 : i64} {
  func.func @_se_kernel(%arg0: i32, %arg1: memref<4x64x128xf32, #tpu.memory_space<vmem>>, %arg2: memref<64x4xf32, #tpu.memory_space<vmem>>, %arg3: memref<4x64xf32, #tpu.memory_space<vmem>>, %arg4: memref<4x64x128xf32, #tpu.memory_space<vmem>>) attributes {dimension_semantics = [#tpu.dimension_semantics<parallel>], iteration_bounds = array<i64: 1>, scalar_prefetch = 0 : i64, scratch_operands = 0 : i64, tpu.core_type = #tpu.core_type<tc>, window_params = [{transform_indices = @transform_0, window_bounds = array<i64: 4, 64, 128>}, {pipeline_mode = #tpu.pipeline_mode<synchronous>, transform_indices = @transform_1, window_bounds = array<i64: 64, 4>}, {pipeline_mode = #tpu.pipeline_mode<synchronous>, transform_indices = @transform_2, window_bounds = array<i64: 4, 64>}, {transform_indices = @transform_3, window_bounds = array<i64: 4, 64, 128>}]} {
    %c0 = arith.constant 0 : index
    %c0_0 = arith.constant 0 : index
    %c0_1 = arith.constant 0 : index
    %0 = vector.load %arg1[%c0, %c0_0, %c0_1] : memref<4x64x128xf32, #tpu.memory_space<vmem>>, vector<4x64x128xf32>
    %cst = arith.constant dense<0.000000e+00> : vector<4x64xf32>
    %1 = vector.multi_reduction <add>, %0, %cst [2] : vector<4x64x128xf32> to vector<4x64xf32>
    %cst_2 = arith.constant 7.812500e-03 : f32
    %2 = vector.broadcast %cst_2 : f32 to vector<4x64xf32>
    %3 = arith.mulf %1, %2 : vector<4x64xf32>
    %c0_3 = arith.constant 0 : index
    %c0_4 = arith.constant 0 : index
    %4 = vector.load %arg2[%c0_3, %c0_4] : memref<64x4xf32, #tpu.memory_space<vmem>>, vector<64x4xf32>
    %cst_5 = arith.constant dense<0.000000e+00> : vector<4x4xf32>
    %5 = tpu.matmul %3, %4, %cst_5 {dimension_numbers = #tpu.dot_dimension_numbers<[1], [0], [0], [1], [0, 0, 1, 1], [], []>} : vector<4x64xf32>, vector<64x4xf32>, vector<4x4xf32> -> vector<4x4xf32>
    %cst_6 = arith.constant 0.000000e+00 : f32
    %6 = vector.broadcast %cst_6 : f32 to vector<4x4xf32>
    %7 = arith.maximumf %5, %6 : vector<4x4xf32>
    %c0_7 = arith.constant 0 : index
    %c0_8 = arith.constant 0 : index
    %8 = vector.load %arg3[%c0_7, %c0_8] : memref<4x64xf32, #tpu.memory_space<vmem>>, vector<4x64xf32>
    %cst_9 = arith.constant dense<0.000000e+00> : vector<4x64xf32>
    %9 = tpu.matmul %7, %8, %cst_9 {dimension_numbers = #tpu.dot_dimension_numbers<[1], [0], [0], [1], [0, 0, 1, 1], [], []>} : vector<4x4xf32>, vector<4x64xf32>, vector<4x64xf32> -> vector<4x64xf32>
    %10 = arith.negf %9 : vector<4x64xf32>
    %11 = math.exp %10 : vector<4x64xf32>
    %cst_10 = arith.constant 1.000000e+00 : f32
    %12 = vector.broadcast %cst_10 : f32 to vector<4x64xf32>
    %13 = arith.addf %12, %11 : vector<4x64xf32>
    %14 = arith.divf %12, %13 : vector<4x64xf32>
    %15 = vector.shape_cast %14 : vector<4x64xf32> to vector<4x64x1xf32>
    %16 = vector.broadcast %15 : vector<4x64x1xf32> to vector<4x64x128xf32>
    %17 = arith.mulf %0, %16 : vector<4x64x128xf32>
    %c0_11 = arith.constant 0 : index
    %c0_12 = arith.constant 0 : index
    %c0_13 = arith.constant 0 : index
    %18 = vector.load %arg4[%c0_11, %c0_12, %c0_13] : memref<4x64x128xf32, #tpu.memory_space<vmem>>, vector<4x64x128xf32>
    tpu.vector_store %arg4[%c0_11, %c0_12, %c0_13], %17 {strides = array<i32>} : memref<4x64x128xf32, #tpu.memory_space<vmem>>, vector<4x64x128xf32>,
    return
  }
  func.func @transform_0(%arg0: i32) -> (i32, i32, i32) {
    %c0_i32 = arith.constant 0 : i32
    %c0_i32_0 = arith.constant 0 : i32
    %c0_i32_1 = arith.constant 0 : i32
    return %arg0, %c0_i32, %c0_i32_0 : i32, i32, i32
  }
  func.func @transform_1(%arg0: i32) -> (i32, i32) {
    %c0_i32 = arith.constant 0 : i32
    %c0_i32_0 = arith.constant 0 : i32
    %c0_i32_1 = arith.constant 0 : i32
    return %c0_i32, %c0_i32_0 : i32, i32
  }
  func.func @transform_2(%arg0: i32) -> (i32, i32) {
    %c0_i32 = arith.constant 0 : i32
    %c0_i32_0 = arith.constant 0 : i32
    %c0_i32_1 = arith.constant 0 : i32
    return %c0_i32, %c0_i32_0 : i32, i32
  }
  func.func @transform_3(%arg0: i32) -> (i32, i32, i32) {
    %c0_i32 = arith.constant 0 : i32
    %c0_i32_0 = arith.constant 0 : i32
    %c0_i32_1 = arith.constant 0 : i32
    return %arg0, %c0_i32, %c0_i32_0 : i32, i32, i32
  }
}

</mosaic_0001>

<llo_original>
// kernel: tpu_custom_call.1
$region0: #{tpu_custom_call.1}
  #allocation0 [shape = 'u32[]', space=smem, size = 0x4, offset = 0x4, fixed_abs, tag = 'smem constant byte address 0x4 - core index']
  #allocation1 [shape = 'u32[72,128]{1,0:T(1,128)}', space=vmem, size = 0x9000, scoped, tag = 'internal scratch']
  %s0 = inlined_call_operand.hbm [shape: f32[4,64,128], index: 0, kind: input, shape index: {}]
  %s1 = inlined_call_operand.vmem [shape: f32[64,4], index: 1, kind: input, shape index: {}]
  %s2 = inlined_call_operand.vmem [shape: f32[4,64], index: 2, kind: input, shape index: {}]
  %s3 = inlined_call_operand.hbm [shape: f32[4,64,128], index: 3, kind: output, shape index: {}]
  %s4 = sld [smem:[#allocation0]]
  $region26: #{tpu_custom_call.1} parent=0
    _
  %s6 = ssub.s32 1, %s4
  %s7 = scalar_select 0, %s6, %s4
  $region1: #{tpu_custom_call.1} parent=0
    #allocation2 [shape = 'u8[131072]{0}', space=vmem, size = 0x20000, scoped, tag = 'input window, operand 0, single buffered']
    #allocation3 [shape = 's32[1]{0}', space=sflag, size = 0x4, scoped, tag = 'scoped memory for tpu_custom_call.1']
    #allocation4 [shape = 's32[1]{0}', space=sflag, size = 0x4, scoped, tag = 'scoped memory for tpu_custom_call.1']
    #allocation5 [shape = 'u8[131072]{0}', space=vmem, size = 0x20000, scoped, tag = 'output window, operand 0, single buffered']
    %8 = vsyncpa [#allocation3], 0
    %9 = vsyncpa [#allocation4], 0
    // Predicated region
    $region2: #{tpu_custom_call.1} parent=1 // pred_check
      _
    $region3: #{tpu_custom_call.1} parent=1 // pred_check_branch
      %11 = sbr.rel (0) target = $region5
    $region4: #{tpu_custom_call.1} parent=1 // pred_region
      %13 = vsyncadd [#allocation3], 0
      %s14 = sshll.u32 %s0, 4
      %s15 = int_to_ptr.hbm [resolvable:$true] %s14
      %s16 = sshll.u32 [#allocation2], 4
      %s17 = int_to_ptr.vmem [resolvable:$true] %s16
      %22 = dma.hbm_to_vmem [thread:$0]  %s15, 4096, %s17, [#allocation3], 128, 128, 8
    $region5: #{tpu_custom_call.1} parent=1 // pred_fallthru
      _
    // Predicated region
    $region6: #{tpu_custom_call.1} parent=1 // pred_check
      _
    $region7: #{tpu_custom_call.1} parent=1 // pred_check_branch
      %24 = sbr.rel (0) target = $region9
    $region8: #{tpu_custom_call.1} parent=1 // pred_region
      _
    $region9: #{tpu_custom_call.1} parent=1 // pred_fallthru
      _
    // Predicated region
    $region10: #{tpu_custom_call.1} parent=1 // pred_check
      _
    $region11: #{tpu_custom_call.1} parent=1 // pred_check_branch
      %26 = sbr.rel (0) target = $region13
    $region12: #{tpu_custom_call.1} parent=1 // pred_region
      _
    $region13: #{tpu_custom_call.1} parent=1 // pred_fallthru
      _
    // Predicated region
    $region14: #{tpu_custom_call.1} parent=1 // pred_check
      _
    $region15: #{tpu_custom_call.1} parent=1 // pred_check_branch
      %28 = sbr.rel (0) target = $region17
    $region16: #{tpu_custom_call.1} parent=1 // pred_region
      %30 = dma.done [#allocation3], 4096
    $region17: #{tpu_custom_call.1} parent=1 // pred_fallthru
      _
    %v31 = vld [vmem:[#allocation2] sm:$0xff]
    %v32 = vld [vmem:[#allocation2 + $0x8] sm:$0xff]
    %v33 = vld [vmem:[#allocation2 + $0x10] sm:$0xff]
    %v34 = vld [vmem:[#allocation2 + $0x18] sm:$0xff]
    %v35 = vld [vmem:[#allocation2 + $0x20] sm:$0xff]
    %v36 = vld [vmem:[#allocation2 + $0x28] sm:$0xff]
    %v37 = vld [vmem:[#allocation2 + $0x30] sm:$0xff]
    %v38 = vld [vmem:[#allocation2 + $0x38] sm:$0xff]
    %v39 = vld [vmem:[#allocation2 + $0x40] sm:$0xff]
    %v40 = vld [vmem:[#allocation2 + $0x48] sm:$0xff]
    %v41 = vld [vmem:[#allocation2 + $0x50] sm:$0xff]
    %v42 = vld [vmem:[#allocation2 + $0x58] sm:$0xff]
    %v43 = vld [vmem:[#allocation2 + $0x60] sm:$0xff]
    %v44 = vld [vmem:[#allocation2 + $0x68] sm:$0xff]
    %v45 = vld [vmem:[#allocation2 + $0x70] sm:$0xff]
    %v46 = vld [vmem:[#allocation2 + $0x78] sm:$0xff]
    %v47 = vld [vmem:[#allocation2 + $0x80] sm:$0xff]
    %v48 = vld [vmem:[#allocation2 + $0x88] sm:$0xff]
    %v49 = vld [vmem:[#allocation2 + $0x90] sm:$0xff]
    %v50 = vld [vmem:[#allocation2 + $0x98] sm:$0xff]
    %v51 = vld [vmem:[#allocation2 + $0xa0] sm:$0xff]
    %v52 = vld [vmem:[#allocation2 + $0xa8] sm:$0xff]
    %v53 = vld [vmem:[#allocation2 + $0xb0] sm:$0xff]
    %v54 = vld [vmem:[#allocation2 + $0xb8] sm:$0xff]
    %v55 = vld [vmem:[#allocation2 + $0xc0] sm:$0xff]
    %v56 = vld [vmem:[#allocation2 + $0xc8] sm:$0xff]
    %v57 = vld [vmem:[#allocation2 + $0xd0] sm:$0xff]
    %v58 = vld [vmem:[#allocation2 + $0xd8] sm:$0xff]
    %v59 = vld [vmem:[#allocation2 + $0xe0] sm:$0xff]
    %v60 = vld [vmem:[#allocation2 + $0xe8] sm:$0xff]
    %v61 = vld [vmem:[#allocation2 + $0xf0] sm:$0xff]
    %v62 = vld [vmem:[#allocation2 + $0xf8] sm:$0xff]
    %63 = vadd.xlane.f32.xlu0 %v31
    %v64 = vpop.xlane.xlu0 %63
    %65 = vadd.xlane.f32.xlu0 %v32
    %v66 = vpop.xlane.xlu0 %65
    %67 = vadd.xlane.f32.xlu0 %v33
    %v68 = vpop.xlane.xlu0 %67
    %69 = vadd.xlane.f32.xlu0 %v34
    %v70 = vpop.xlane.xlu0 %69
    %71 = vadd.xlane.f32.xlu0 %v35
    %v72 = vpop.xlane.xlu0 %71
    %73 = vadd.xlane.f32.xlu0 %v36
    %v74 = vpop.xlane.xlu0 %73
    %75 = vadd.xlane.f32.xlu0 %v37
    %v76 = vpop.xlane.xlu0 %75
    %77 = vadd.xlane.f32.xlu0 %v38
    %v78 = vpop.xlane.xlu0 %77
    %79 = vadd.xlane.f32.xlu0 %v39
    %v80 = vpop.xlane.xlu0 %79
    %81 = vadd.xlane.f32.xlu0 %v40
    %v82 = vpop.xlane.xlu0 %81
    %83 = vadd.xlane.f32.xlu0 %v41
    %v84 = vpop.xlane.xlu0 %83
    %85 = vadd.xlane.f32.xlu0 %v42
    %v86 = vpop.xlane.xlu0 %85
    %87 = vadd.xlane.f32.xlu0 %v43
    %v88 = vpop.xlane.xlu0 %87
    %89 = vadd.xlane.f32.xlu0 %v44
    %v90 = vpop.xlane.xlu0 %89
    %91 = vadd.xlane.f32.xlu0 %v45
    %v92 = vpop.xlane.xlu0 %91
    %93 = vadd.xlane.f32.xlu0 %v46
    %v94 = vpop.xlane.xlu0 %93
    %95 = vadd.xlane.f32.xlu0 %v47
    %v96 = vpop.xlane.xlu0 %95
    %97 = vadd.xlane.f32.xlu0 %v48
    %v98 = vpop.xlane.xlu0 %97
    %99 = vadd.xlane.f32.xlu0 %v49
    %v100 = vpop.xlane.xlu0 %99
    %101 = vadd.xlane.f32.xlu0 %v50
    %v102 = vpop.xlane.xlu0 %101
    %103 = vadd.xlane.f32.xlu0 %v51
    %v104 = vpop.xlane.xlu0 %103
    %105 = vadd.xlane.f32.xlu0 %v52
    %v106 = vpop.xlane.xlu0 %105
    %107 = vadd.xlane.f32.xlu0 %v53
    %v108 = vpop.xlane.xlu0 %107
    %109 = vadd.xlane.f32.xlu0 %v54
    %v110 = vpop.xlane.xlu0 %109
    %111 = vadd.xlane.f32.xlu0 %v55
    %v112 = vpop.xlane.xlu0 %111
    %113 = vadd.xlane.f32.xlu0 %v56
    %v114 = vpop.xlane.xlu0 %113
    %115 = vadd.xlane.f32.xlu0 %v57
    %v116 = vpop.xlane.xlu0 %115
    %117 = vadd.xlane.f32.xlu0 %v58
    %v118 = vpop.xlane.xlu0 %117
    %119 = vadd.xlane.f32.xlu0 %v59
    %v120 = vpop.xlane.xlu0 %119
    %121 = vadd.xlane.f32.xlu0 %v60
    %v122 = vpop.xlane.xlu0 %121
    %123 = vadd.xlane.f32.xlu0 %v61
    %v124 = vpop.xlane.xlu0 %123
    %125 = vadd.xlane.f32.xlu0 %v62
    %v126 = vpop.xlane.xlu0 %125
    %v127 = vmul.f32 %v64, 0.0078125
    %v128 = vmul.f32 %v66, 0.0078125
    %v129 = vmul.f32 %v68, 0.0078125
    %v130 = vmul.f32 %v70, 0.0078125
    %v131 = vmul.f32 %v72, 0.0078125
    %v132 = vmul.f32 %v74, 0.0078125
    %v133 = vmul.f32 %v76, 0.0078125
    %v134 = vmul.f32 %v78, 0.0078125
    %v135 = vmul.f32 %v80, 0.0078125
    %v136 = vmul.f32 %v82, 0.0078125
    %v137 = vmul.f32 %v84, 0.0078125
    %v138 = vmul.f32 %v86, 0.0078125
    %v139 = vmul.f32 %v88, 0.0078125
    %v140 = vmul.f32 %v90, 0.0078125
    %v141 = vmul.f32 %v92, 0.0078125
    %v142 = vmul.f32 %v94, 0.0078125
    %v143 = vmul.f32 %v96, 0.0078125
    %v144 = vmul.f32 %v98, 0.0078125
    %v145 = vmul.f32 %v100, 0.0078125
    %v146 = vmul.f32 %v102, 0.0078125
    %v147 = vmul.f32 %v104, 0.0078125
    %v148 = vmul.f32 %v106, 0.0078125
    %v149 = vmul.f32 %v108, 0.0078125
    %v150 = vmul.f32 %v110, 0.0078125
    %v151 = vmul.f32 %v112, 0.0078125
    %v152 = vmul.f32 %v114, 0.0078125
    %v153 = vmul.f32 %v116, 0.0078125
    %v154 = vmul.f32 %v118, 0.0078125
    %v155 = vmul.f32 %v120, 0.0078125
    %v156 = vmul.f32 %v122, 0.0078125
    %v157 = vmul.f32 %v124, 0.0078125
    %v158 = vmul.f32 %v126, 0.0078125
    %v159 = vld [vmem:[%s1] sm:$0xff]
    %v160 = vld [vmem:[%s1 + $0x8] sm:$0xff]
    %v161 = vld [vmem:[%s1 + $0x10] sm:$0xff]
    %v162 = vld [vmem:[%s1 + $0x18] sm:$0xff]
    %v163 = vld [vmem:[%s1 + $0x20] sm:$0xff]
    %v164 = vld [vmem:[%s1 + $0x28] sm:$0xff]
    %v165 = vld [vmem:[%s1 + $0x30] sm:$0xff]
    %v166 = vld [vmem:[%s1 + $0x38] sm:$0xff]
    %v199 = vlaneseq
    %v200 = vand.u32 %v199, 127
    %v201 = vperm.slane %v127, %v200
    %v202 = vadd.s32 %v200, 4294967288
    %v203 = vperm.slane %v128, %v202
    %vm204 = vcmask 130112
    %v205 = vsel %vm204, %v203, %v201
    %v206 = vadd.s32 %v200, 4294967280
    %v207 = vperm.slane %v129, %v206
    %vm208 = vcmask 195712
    %v209 = vsel %vm208, %v207, %v205
    %v210 = vadd.s32 %v200, 4294967272
    %v211 = vperm.slane %v130, %v210
    %vm212 = vcmask 261312
    %v213 = vsel %vm212, %v211, %v209
    %v214 = vadd.s32 %v200, 4294967264
    %v215 = vperm.slane %v131, %v214
    %vm216 = vcmask 326912
    %v217 = vsel %vm216, %v215, %v213
    %v218 = vadd.s32 %v200, 4294967256
    %v219 = vperm.slane %v132, %v218
    %vm220 = vcmask 392512
    %v221 = vsel %vm220, %v219, %v217
    %v222 = vadd.s32 %v200, 4294967248
    %v223 = vperm.slane %v133, %v222
    %vm224 = vcmask 458112
    %v225 = vsel %vm224, %v223, %v221
    %v226 = vadd.s32 %v200, 4294967240
    %v227 = vperm.slane %v134, %v226
    %vm228 = vcmask 523712
    %v229 = vsel %vm228, %v227, %v225
    %v230 = vperm.slane %v135, %v200
    %v231 = vperm.slane %v136, %v202
    %v232 = vsel %vm204, %v231, %v230
    %v233 = vperm.slane %v137, %v206
    %v234 = vsel %vm208, %v233, %v232
    %v235 = vperm.slane %v138, %v210
    %v236 = vsel %vm212, %v235, %v234
    %v237 = vperm.slane %v139, %v214
    %v238 = vsel %vm216, %v237, %v236
    %v239 = vperm.slane %v140, %v218
    %v240 = vsel %vm220, %v239, %v238
    %v241 = vperm.slane %v141, %v222
    %v242 = vsel %vm224, %v241, %v240
    %v243 = vperm.slane %v142, %v226
    %v244 = vsel %vm228, %v243, %v242
    %v245 = vperm.slane %v143, %v200
    %v246 = vperm.slane %v144, %v202
    %v247 = vsel %vm204, %v246, %v245
    %v248 = vperm.slane %v145, %v206
    %v249 = vsel %vm208, %v248, %v247
    %v250 = vperm.slane %v146, %v210
    %v251 = vsel %vm212, %v250, %v249
    %v252 = vperm.slane %v147, %v214
    %v253 = vsel %vm216, %v252, %v251
    %v254 = vperm.slane %v148, %v218
    %v255 = vsel %vm220, %v254, %v253
    %v256 = vperm.slane %v149, %v222
    %v257 = vsel %vm224, %v256, %v255
    %v258 = vperm.slane %v150, %v226
    %v259 = vsel %vm228, %v258, %v257
    %v260 = vperm.slane %v151, %v200
    %v261 = vperm.slane %v152, %v202
    %v262 = vsel %vm204, %v261, %v260
    %v263 = vperm.slane %v153, %v206
    %v264 = vsel %vm208, %v263, %v262
    %v265 = vperm.slane %v154, %v210
    %v266 = vsel %vm212, %v265, %v264
    %v267 = vperm.slane %v155, %v214
    %v268 = vsel %vm216, %v267, %v266
    %v269 = vperm.slane %v156, %v218
    %v270 = vsel %vm220, %v269, %v268
    %v271 = vperm.slane %v157, %v222
    %v272 = vsel %vm224, %v271, %v270
    %v273 = vperm.slane %v158, %v226
    %v274 = vsel %vm228, %v273, %v272
    %vm275 = vcmask 1041409
    %v276 = vsel %vm275, %v244, %v229
    %vm277 = vcmask 1042434
    %v278 = vsel %vm277, %v259, %v276
    %vm279 = vcmask 1043459
    %v280 = vsel %vm279, %v274, %v278
    %vm281 = vcmask 523264
    %v282 = vsel %vm281, %v280, 0
    %284 = vmatpush.msra.mxu0 0.0
    %285 = vmatpush.msra.mxu0 0.0
    %286 = vmatpush.msra.mxu0 0.0
    %287 = vmatpush.msra.mxu0 0.0
    %288 = vmatpush.msra.mxu0 0.0
    %289 = vmatpush.msra.mxu0 0.0
    %290 = vmatpush.msra.mxu0 0.0
    %291 = vmatpush.msra.mxu0 0.0
    %292 = vmatpush.msra.mxu0 %v166
    %293 = vmatpush.msra.mxu0 %v165
    %294 = vmatpush.msra.mxu0 %v164
    %295 = vmatpush.msra.mxu0 %v163
    %296 = vmatpush.msra.mxu0 %v162
    %297 = vmatpush.msra.mxu0 %v161
    %298 = vmatpush.msra.mxu0 %v160
    %299 = vmatpush.msra.mxu0 %v159
    %300 = vmatmul.f32.gmra.mxu0 %v282
    %v301 = vpop.f32.mrf.mxu0
    %v302 = vadd.f32 0.0, %v301
    %303 = vdwg.mxu0
    %v304 = vmax.f32 %v302, 0.0
    %v305 = vld [vmem:[%s2] sm:$0xf]
    %vm306 = vcmask 31744
    %v308 = vsel %vm306, %v304, 0
    %vm310 = vcmask 1043456
    %v312 = vsel %vm310, %v305, 0
    %314 = vmatpush.msra.mxu0 0.0
    %315 = vmatpush.msra.mxu0 0.0
    %316 = vmatpush.msra.mxu0 0.0
    %317 = vmatpush.msra.mxu0 0.0
    %318 = vmatpush.msra.mxu0 0.0
    %319 = vmatpush.msra.mxu0 0.0
    %320 = vmatpush.msra.mxu0 0.0
    %321 = vmatpush.msra.mxu0 0.0
    %322 = vmatpush.msra.mxu0 0.0
    %323 = vmatpush.msra.mxu0 0.0
    %324 = vmatpush.msra.mxu0 0.0
    %325 = vmatpush.msra.mxu0 0.0
    %326 = vmatpush.msra.mxu0 0.0
    %327 = vmatpush.msra.mxu0 0.0
    %328 = vmatpush.msra.mxu0 0.0
    %329 = vmatpush.msra.mxu0 %v312
    %330 = vmatmul.f32.gmra.mxu0 %v308
    %v331 = vpop.f32.mrf.mxu0
    %v332 = vadd.f32 0.0, %v331
    %333 = vdwg.mxu0
    %v334 = vxor.u32 %v332, 2147483648
    %v335 = vmul.f32 %v334, 1.442695
    %v336 = vpow.pop %v335
    %v337 = vadd.f32 %v336, 1.0
    %v338 = vrcp.pop %v337
    %v339 = vmul.f32 %v337, %v338
    %v340 = vsub.f32 1.0, %v339
    %v341 = vmul.f32 %v338, %v340
    %v342 = vadd.f32 %v338, %v341
    %vm343 = vweird.f32 %v337
    %vm344 = vweird.f32 %v338
    %vm345 = vmor %vm343, %vm344
    %v346 = vsel %vm345, %v338, %v342
    %v347 = vand.u32 2147483647, %v337
    %vm348 = vcmp.eq.f32.partialorder %v347, 8.507059e+37
    %v349 = vand.u32 %v337, 2147483648
    %v350 = vor.u32 1.1754944e-38, %v349
    %v351 = vsel %vm348, %v350, %v346
    %v352 = vmul.f32 1.0, %v351
    %v353 = vperm.slane %v352, 0
    %v354 = vlaneseq
    %v355 = vshrl.u32 %v354, 7
    %357 = vset.pattern.permute.xlu0 %v355
    %358 = vperm.xlu0 %357, %v353
    %v359 = vpop.permute.xlu0 %358
    %v360 = vlaneseq
    %v361 = vshrl.u32 %v360, 7
    %v362 = vadd.s32 %v361, 8
    %363 = vset.pattern.permute.xlu0 %v362
    %364 = vperm.xlu0 %363, %v353
    %v365 = vpop.permute.xlu0 %364
    %v366 = vlaneseq
    %v367 = vshrl.u32 %v366, 7
    %v368 = vadd.s32 %v367, 16
    %369 = vset.pattern.permute.xlu0 %v368
    %370 = vperm.xlu0 %369, %v353
    %v371 = vpop.permute.xlu0 %370
    %v372 = vlaneseq
    %v373 = vshrl.u32 %v372, 7
    %v374 = vadd.s32 %v373, 24
    %375 = vset.pattern.permute.xlu0 %v374
    %376 = vperm.xlu0 %375, %v353
    %v377 = vpop.permute.xlu0 %376
    %v378 = vlaneseq
    %v379 = vshrl.u32 %v378, 7
    %v380 = vadd.s32 %v379, 32
    %381 = vset.pattern.permute.xlu0 %v380
    %382 = vperm.xlu0 %381, %v353
    %v383 = vpop.permute.xlu0 %382
    %v384 = vlaneseq
    %v385 = vshrl.u32 %v384, 7
    %v386 = vadd.s32 %v385, 40
    %387 = vset.pattern.permute.xlu0 %v386
    %388 = vperm.xlu0 %387, %v353
    %v389 = vpop.permute.xlu0 %388
    %v390 = vlaneseq
    %v391 = vshrl.u32 %v390, 7
    %v392 = vadd.s32 %v391, 48
    %393 = vset.pattern.permute.xlu0 %v392
    %394 = vperm.xlu0 %393, %v353
    %v395 = vpop.permute.xlu0 %394
    %v396 = vlaneseq
    %v397 = vshrl.u32 %v396, 7
    %v398 = vadd.s32 %v397, 56
    %399 = vset.pattern.permute.xlu0 %v398
    %400 = vperm.xlu0 %399, %v353
    %v401 = vpop.permute.xlu0 %400
    %v402 = vperm.slane %v352, 1
    %v403 = vlaneseq
    %v404 = vshrl.u32 %v403, 7
    %406 = vset.pattern.permute.xlu0 %v404
    %407 = vperm.xlu0 %406, %v402
    %v408 = vpop.permute.xlu0 %407
    %v409 = vlaneseq
    %v410 = vshrl.u32 %v409, 7
    %v411 = vadd.s32 %v410, 8
    %412 = vset.pattern.permute.xlu0 %v411
    %413 = vperm.xlu0 %412, %v402
    %v414 = vpop.permute.xlu0 %413
    %v415 = vlaneseq
    %v416 = vshrl.u32 %v415, 7
    %v417 = vadd.s32 %v416, 16
    %418 = vset.pattern.permute.xlu0 %v417
    %419 = vperm.xlu0 %418, %v402
    %v420 = vpop.permute.xlu0 %419
    %v421 = vlaneseq
    %v422 = vshrl.u32 %v421, 7
    %v423 = vadd.s32 %v422, 24
    %424 = vset.pattern.permute.xlu0 %v423
    %425 = vperm.xlu0 %424, %v402
    %v426 = vpop.permute.xlu0 %425
    %v427 = vlaneseq
    %v428 = vshrl.u32 %v427, 7
    %v429 = vadd.s32 %v428, 32
    %430 = vset.pattern.permute.xlu0 %v429
    %431 = vperm.xlu0 %430, %v402
    %v432 = vpop.permute.xlu0 %431
    %v433 = vlaneseq
    %v434 = vshrl.u32 %v433, 7
    %v435 = vadd.s32 %v434, 40
    %436 = vset.pattern.permute.xlu0 %v435
    %437 = vperm.xlu0 %436, %v402
    %v438 = vpop.permute.xlu0 %437
    %v439 = vlaneseq
    %v440 = vshrl.u32 %v439, 7
    %v441 = vadd.s32 %v440, 48
    %442 = vset.pattern.permute.xlu0 %v441
    %443 = vperm.xlu0 %442, %v402
    %v444 = vpop.permute.xlu0 %443
    %v445 = vlaneseq
    %v446 = vshrl.u32 %v445, 7
    %v447 = vadd.s32 %v446, 56
    %448 = vset.pattern.permute.xlu0 %v447
    %449 = vperm.xlu0 %448, %v402
    %v450 = vpop.permute.xlu0 %449
    %v451 = vperm.slane %v352, 2
    %v452 = vlaneseq
    %v453 = vshrl.u32 %v452, 7
    %455 = vset.pattern.permute.xlu0 %v453
    %456 = vperm.xlu0 %455, %v451
    %v457 = vpop.permute.xlu0 %456
    %v458 = vlaneseq
    %v459 = vshrl.u32 %v458, 7
    %v460 = vadd.s32 %v459, 8
    %461 = vset.pattern.permute.xlu0 %v460
    %462 = vperm.xlu0 %461, %v451
    %v463 = vpop.permute.xlu0 %462
    %v464 = vlaneseq
    %v465 = vshrl.u32 %v464, 7
    %v466 = vadd.s32 %v465, 16
    %467 = vset.pattern.permute.xlu0 %v466
    %468 = vperm.xlu0 %467, %v451
    %v469 = vpop.permute.xlu0 %468
    %v470 = vlaneseq
    %v471 = vshrl.u32 %v470, 7
    %v472 = vadd.s32 %v471, 24
    %473 = vset.pattern.permute.xlu0 %v472
    %474 = vperm.xlu0 %473, %v451
    %v475 = vpop.permute.xlu0 %474
    %v476 = vlaneseq
    %v477 = vshrl.u32 %v476, 7
    %v478 = vadd.s32 %v477, 32
    %479 = vset.pattern.permute.xlu0 %v478
    %480 = vperm.xlu0 %479, %v451
    %v481 = vpop.permute.xlu0 %480
    %v482 = vlaneseq
    %v483 = vshrl.u32 %v482, 7
    %v484 = vadd.s32 %v483, 40
    %485 = vset.pattern.permute.xlu0 %v484
    %486 = vperm.xlu0 %485, %v451
    %v487 = vpop.permute.xlu0 %486
    %v488 = vlaneseq
    %v489 = vshrl.u32 %v488, 7
    %v490 = vadd.s32 %v489, 48
    %491 = vset.pattern.permute.xlu0 %v490
    %492 = vperm.xlu0 %491, %v451
    %v493 = vpop.permute.xlu0 %492
    %v494 = vlaneseq
    %v495 = vshrl.u32 %v494, 7
    %v496 = vadd.s32 %v495, 56
    %497 = vset.pattern.permute.xlu0 %v496
    %498 = vperm.xlu0 %497, %v451
    %v499 = vpop.permute.xlu0 %498
    %v500 = vperm.slane %v352, 3
    %v501 = vlaneseq
    %v502 = vshrl.u32 %v501, 7
    %504 = vset.pattern.permute.xlu0 %v502
    %505 = vperm.xlu0 %504, %v500
    %v506 = vpop.permute.xlu0 %505
    %v507 = vlaneseq
    %v508 = vshrl.u32 %v507, 7
    %v509 = vadd.s32 %v508, 8
    %510 = vset.pattern.permute.xlu0 %v509
    %511 = vperm.xlu0 %510, %v500
    %v512 = vpop.permute.xlu0 %511
    %v513 = vlaneseq
    %v514 = vshrl.u32 %v513, 7
    %v515 = vadd.s32 %v514, 16
    %516 = vset.pattern.permute.xlu0 %v515
    %517 = vperm.xlu0 %516, %v500
    %v518 = vpop.permute.xlu0 %517
    %v519 = vlaneseq
    %v520 = vshrl.u32 %v519, 7
    %v521 = vadd.s32 %v520, 24
    %522 = vset.pattern.permute.xlu0 %v521
    %523 = vperm.xlu0 %522, %v500
    %v524 = vpop.permute.xlu0 %523
    %v525 = vlaneseq
    %v526 = vshrl.u32 %v525, 7
    %v527 = vadd.s32 %v526, 32
    %528 = vset.pattern.permute.xlu0 %v527
    %529 = vperm.xlu0 %528, %v500
    %v530 = vpop.permute.xlu0 %529
    %v531 = vlaneseq
    %v532 = vshrl.u32 %v531, 7
    %v533 = vadd.s32 %v532, 40
    %534 = vset.pattern.permute.xlu0 %v533
    %535 = vperm.xlu0 %534, %v500
    %v536 = vpop.permute.xlu0 %535
    %v537 = vlaneseq
    %v538 = vshrl.u32 %v537, 7
    %v539 = vadd.s32 %v538, 48
    %540 = vset.pattern.permute.xlu0 %v539
    %541 = vperm.xlu0 %540, %v500
    %v542 = vpop.permute.xlu0 %541
    %v543 = vlaneseq
    %v544 = vshrl.u32 %v543, 7
    %v545 = vadd.s32 %v544, 56
    %546 = vset.pattern.permute.xlu0 %v545
    %547 = vperm.xlu0 %546, %v500
    %v548 = vpop.permute.xlu0 %547
    %v549 = vmul.f32 %v31, %v359
    %v550 = vmul.f32 %v32, %v365
    %v551 = vmul.f32 %v33, %v371
    %v552 = vmul.f32 %v34, %v377
    %v553 = vmul.f32 %v35, %v383
    %v554 = vmul.f32 %v36, %v389
    %v555 = vmul.f32 %v37, %v395
    %v556 = vmul.f32 %v38, %v401
    %v557 = vmul.f32 %v39, %v408
    %v558 = vmul.f32 %v40, %v414
    %v559 = vmul.f32 %v41, %v420
    %v560 = vmul.f32 %v42, %v426
    %v561 = vmul.f32 %v43, %v432
    %v562 = vmul.f32 %v44, %v438
    %v563 = vmul.f32 %v45, %v444
    %v564 = vmul.f32 %v46, %v450
    %v565 = vmul.f32 %v47, %v457
    %v566 = vmul.f32 %v48, %v463
    %v567 = vmul.f32 %v49, %v469
    %v568 = vmul.f32 %v50, %v475
    %v569 = vmul.f32 %v51, %v481
    %v570 = vmul.f32 %v52, %v487
    %v571 = vmul.f32 %v53, %v493
    %v572 = vmul.f32 %v54, %v499
    %v573 = vmul.f32 %v55, %v506
    %v574 = vmul.f32 %v56, %v512
    %v575 = vmul.f32 %v57, %v518
    %v576 = vmul.f32 %v58, %v524
    %v577 = vmul.f32 %v59, %v530
    %v578 = vmul.f32 %v60, %v536
    %v579 = vmul.f32 %v61, %v542
    %v580 = vmul.f32 %v62, %v548
    %581 = vst [vmem:[#allocation5] sm:$0xff] %v549
    %582 = vst [vmem:[#allocation5 + $0x8] sm:$0xff] %v550
    %583 = vst [vmem:[#allocation5 + $0x10] sm:$0xff] %v551
    %584 = vst [vmem:[#allocation5 + $0x18] sm:$0xff] %v552
    %585 = vst [vmem:[#allocation5 + $0x20] sm:$0xff] %v553
    %586 = vst [vmem:[#allocation5 + $0x28] sm:$0xff] %v554
    %587 = vst [vmem:[#allocation5 + $0x30] sm:$0xff] %v555
    %588 = vst [vmem:[#allocation5 + $0x38] sm:$0xff] %v556
    %589 = vst [vmem:[#allocation5 + $0x40] sm:$0xff] %v557
    %590 = vst [vmem:[#allocation5 + $0x48] sm:$0xff] %v558
    %591 = vst [vmem:[#allocation5 + $0x50] sm:$0xff] %v559
    %592 = vst [vmem:[#allocation5 + $0x58] sm:$0xff] %v560
    %593 = vst [vmem:[#allocation5 + $0x60] sm:$0xff] %v561
    %594 = vst [vmem:[#allocation5 + $0x68] sm:$0xff] %v562
    %595 = vst [vmem:[#allocation5 + $0x70] sm:$0xff] %v563
    %596 = vst [vmem:[#allocation5 + $0x78] sm:$0xff] %v564
    %597 = vst [vmem:[#allocation5 + $0x80] sm:$0xff] %v565
    %598 = vst [vmem:[#allocation5 + $0x88] sm:$0xff] %v566
    %599 = vst [vmem:[#allocation5 + $0x90] sm:$0xff] %v567
    %600 = vst [vmem:[#allocation5 + $0x98] sm:$0xff] %v568
    %601 = vst [vmem:[#allocation5 + $0xa0] sm:$0xff] %v569
    %602 = vst [vmem:[#allocation5 + $0xa8] sm:$0xff] %v570
    %603 = vst [vmem:[#allocation5 + $0xb0] sm:$0xff] %v571
    %604 = vst [vmem:[#allocation5 + $0xb8] sm:$0xff] %v572
    %605 = vst [vmem:[#allocation5 + $0xc0] sm:$0xff] %v573
    %606 = vst [vmem:[#allocation5 + $0xc8] sm:$0xff] %v574
    %607 = vst [vmem:[#allocation5 + $0xd0] sm:$0xff] %v575
    %608 = vst [vmem:[#allocation5 + $0xd8] sm:$0xff] %v576
    %609 = vst [vmem:[#allocation5 + $0xe0] sm:$0xff] %v577
    %610 = vst [vmem:[#allocation5 + $0xe8] sm:$0xff] %v578
    %611 = vst [vmem:[#allocation5 + $0xf0] sm:$0xff] %v579
    %612 = vst [vmem:[#allocation5 + $0xf8] sm:$0xff] %v580
    // Predicated region
    $region18: #{tpu_custom_call.1} parent=1 // pred_check
      _
    $region19: #{tpu_custom_call.1} parent=1 // pred_check_branch
      %614 = sbr.rel (0) target = $region21
    $region20: #{tpu_custom_call.1} parent=1 // pred_region
      %616 = vsyncadd [#allocation4], 0
      %s617 = sshll.u32 [#allocation5], 4
      %s618 = int_to_ptr.vmem [resolvable:$true] %s617
      %s619 = sshll.u32 %s3, 4
      %s620 = int_to_ptr.hbm [resolvable:$true] %s619
      %625 = dma.vmem_to_hbm [thread:$0]  %s618, 4096, %s620, [#allocation4], 128, 128, 8
    $region21: #{tpu_custom_call.1} parent=1 // pred_fallthru
      _
    // Predicated region
    $region22: #{tpu_custom_call.1} parent=1 // pred_check
      _
    $region23: #{tpu_custom_call.1} parent=1 // pred_check_branch
      %627 = sbr.rel (0) target = $region25
    $region24: #{tpu_custom_call.1} parent=1 // pred_region
      %629 = dma.done [#allocation4], 4096
    $region25: #{tpu_custom_call.1} parent=1 // pred_fallthru
      _
    %630 = vsyncpa [#allocation3], 1
    %631 = vsyncpa [#allocation4], 1

</llo_original>
